<compile_context>
chip_gen: v7x
topology: tpu7x:2x2x1
jax: 0.10.0
libtpu: 0.0.40
codegen_flags: <defaults>
</compile_context>

<pallas_src>
import math

import jax
import jax.numpy as jnp
from jax.experimental import pallas as pl
from jax.experimental.pallas import tpu as pltpu

_TWO_PI_HI = 6.28125                       # exactly representable in f32
_TWO_PI_LO = 2.0 * math.pi - _TWO_PI_HI    # low part of the 2*pi split
_INV_TWO_PI = 1.0 / (2.0 * math.pi)
_HALF_PI = 0.5 * math.pi


def _cdiv(a: int, b: int) -> int:
    return -(-a // b)


def _round_up(x: int, m: int) -> int:
    return _cdiv(x, m) * m


def _choose_pack(dim: int) -> int:
    """Timesteps packed per output row so the lane width r*dim is a multiple
    of 128 (unmasked stores), preferring >= 256 lanes, with a bounded
    in-kernel expansion unroll."""
    if dim % 128 == 0:
        return 1 if dim >= 256 else 2            # dim == 128 -> pack 2 rows
    best = 1
    for r in range(2, 33):
        if (r * dim) % 128 == 0:
            if r * dim >= 256:
                return r
            best = max(best, r)                  # 128-lane option
    return best                                   # may be 1: masked fallback


def _make_kernel(r: int, dim: int):
    def kernel(time_ref, freqs_ref, phase_ref, out_ref):
        # time_ref : (tb_rows, r)       f32 -- r timesteps per packed row
        # freqs_ref: (1, r*dim)         f32 -- tile([f, f], r)
        # phase_ref: (1, r*dim)         f32 -- tile([0.., pi/2..], r) -> cos
        # out_ref  : (tb_rows, r*dim)
        t = time_ref[...]
        tb_rows = t.shape[0]

        # Expand each of the r per-row timesteps across its dim-wide lane
        # group (lane broadcast + lane concat -> XLU work, off the VALU/EUP
        # path), so all arithmetic below runs on full 128-lane vregs.
        groups = [jnp.broadcast_to(t[:, g:g + 1], (tb_rows, dim))
                  for g in range(r)]
        t_exp = groups[0] if r == 1 else jnp.concatenate(groups, axis=-1)

        args = t_exp * freqs_ref[...]                       # (tb_rows, r*dim)

        # Cody-Waite reduction into ~[-pi, pi] (exact while |args| <~ 4e5,
        # i.e. any sane diffusion timestep) so accuracy does not depend on the
        # backend's large-argument trig reduction.
        k = jnp.floor(args * _INV_TWO_PI + 0.5)
        red = (args - k * _TWO_PI_HI) - k * _TWO_PI_LO

        # cos half via sin(x + pi/2); phase added post-reduction so its
        # rounding error is ~ulp(pi), independent of |t|.
        out_ref[...] = jnp.sin(red + phase_ref[...]).astype(out_ref.dtype)

    return kernel


def sinusoidal_position_embeddings(time: jax.Array, dim: int, *,
                                   out_dtype=jnp.float32,
                                   vmem_budget_bytes: int = 10 << 20
                                   ) -> jax.Array:
    """Equivalent of SinusoidalPositionEmbeddings(dim)(time) in PyTorch.

    out_dtype=jnp.bfloat16 is a free win on store-bound v5e (compute stays
    f32; only the writeback is narrowed); default f32 matches the module.
    """
    assert time.ndim == 1, "time must be a 1-D tensor of timesteps"
    assert dim % 2 == 0 and dim >= 4, "dim must be even and >= 4"
    B = time.shape[0]
    half_dim = dim // 2

    r = _choose_pack(dim)
    lane_w = r * dim

    # Frequency table (same math as the torch module), duplicated for the
    # sin|cos halves and tiled across the r packed row-groups; the phase row
    # selects cos via sin(x + pi/2).
    scale = math.log(10000.0) / (half_dim - 1)
    base = jnp.exp(jnp.arange(half_dim, dtype=jnp.float32) * -scale)
    freqs_row = jnp.tile(jnp.concatenate([base, base]), r).reshape(1, lane_w)
    phase_row = jnp.tile(
        jnp.concatenate([jnp.zeros((half_dim,), jnp.float32),
                         jnp.full((half_dim,), _HALF_PI, jnp.float32)]),
        r).reshape(1, lane_w)

    # --- dim-aware, VMEM-budgeted tile sizing --------------------------------
    out_bytes_pp = lane_w * jnp.dtype(out_dtype).itemsize   # per packed row
    time_bytes_pp = 128 * 4                                  # lane-padded (r<128)
    per_row = 2 * (out_bytes_pp + time_bytes_pp)             # double-buffered
    tb_budget = max(8, (vmem_budget_bytes // per_row) // 8 * 8)

    rows_total = _cdiv(B, r)                                  # packed rows
    grid_n = max(1, _cdiv(rows_total, tb_budget))
    if rows_total * out_bytes_pp >= (1 << 20):
        grid_n = max(grid_n, 2)          # let v7x's 2 TensorCores both work
    tb_rows = _round_up(_cdiv(rows_total, grid_n), 8)
    rows_padded = tb_rows * grid_n
    Bp = rows_padded * r

    t32 = time.astype(jnp.float32)
    if Bp != B:
        t32 = jnp.pad(t32, (0, Bp - B))   # padded rows produce emb(0), sliced off
    t2d = t32.reshape(rows_padded, r)

    out = pl.pallas_call(
        _make_kernel(r, dim),
        out_shape=jax.ShapeDtypeStruct((rows_padded, lane_w), out_dtype),
        grid_spec=pltpu.PrefetchScalarGridSpec(
            num_scalar_prefetch=0,
            grid=(grid_n,),
            in_specs=[
                pl.BlockSpec((tb_rows, r), lambda i: (i, 0)),       # time tile
                pl.BlockSpec((1, lane_w), lambda i: (0, 0)),        # freqs (shared)
                pl.BlockSpec((1, lane_w), lambda i: (0, 0)),        # phase (shared)
            ],
            out_specs=pl.BlockSpec((tb_rows, lane_w), lambda i: (i, 0)),
        ),
        compiler_params=pltpu.CompilerParams(
            dimension_semantics=("parallel",)),
    )(t2d, freqs_row, phase_row)

    # (rows_padded, r*dim) -> (Bp, dim) is a free row-major reshape.
    out = out.reshape(Bp, dim)
    if Bp != B:
        out = out[:B]
    return out


def _reference(time: jax.Array, dim: int) -> jax.Array:
    # Pure-JAX reference mirroring the PyTorch module.
    half_dim = dim // 2
    emb = math.log(10000.0) / (half_dim - 1)
    emb = jnp.exp(jnp.arange(half_dim, dtype=jnp.float32) * -emb)
    emb = time.astype(jnp.float32)[:, None] * emb[None, :]
    return jnp.concatenate([jnp.sin(emb), jnp.cos(emb)], axis=-1)


if __name__ == "__main__":
    key = jax.random.PRNGKey(0)
    batch = 8
    dim = 32
    # Deterministic "timesteps": random integers in [0, 1000) as floats.
    time = jax.random.randint(key, (batch,), 0, 1000).astype(jnp.float32)

    out = jax.block_until_ready(sinusoidal_position_embeddings(time, dim))
    ref = _reference(time, dim)

    assert out.shape == (batch, dim)
    assert out.dtype == jnp.float32
    # f32 trig at arguments up to ~1e3 rad: backend argument-reduction
    # differences are O(1e-4); outputs live in [-1, 1] so atol=1e-3 is a
    # meaningful check.
    err = float(jnp.max(jnp.abs(out - ref)))
    assert jnp.allclose(out, ref, atol=1e-3, rtol=1e-3), f"max abs err = {err}"

    print("KERNEL_OK")
</pallas_src>

<mosaic_0001>
module attributes {stable_mosaic.version = 11 : i64} {
  func.func @kernel(%arg0: i32, %arg1: memref<8x8xf32, #tpu.memory_space<vmem>>, %arg2: memref<1x256xf32, #tpu.memory_space<vmem>>, %arg3: memref<1x256xf32, #tpu.memory_space<vmem>>, %arg4: memref<8x256xf32, #tpu.memory_space<vmem>>) attributes {dimension_semantics = [#tpu.dimension_semantics<parallel>], iteration_bounds = array<i64: 1>, scalar_prefetch = 0 : i64, scratch_operands = 0 : i64, tpu.core_type = #tpu.core_type<tc>, window_params = [{transform_indices = @transform_0, window_bounds = array<i64: 8, 8>}, {pipeline_mode = #tpu.pipeline_mode<synchronous>, transform_indices = @transform_1, window_bounds = array<i64: 1, 256>}, {pipeline_mode = #tpu.pipeline_mode<synchronous>, transform_indices = @transform_2, window_bounds = array<i64: 1, 256>}, {transform_indices = @transform_3, window_bounds = array<i64: 8, 256>}]} {
    %c0 = arith.constant 0 : index
    %c0_0 = arith.constant 0 : index
    %0 = vector.load %arg1[%c0, %c0_0] : memref<8x8xf32, #tpu.memory_space<vmem>>, vector<8x8xf32>
    %1 = vector.extract_strided_slice %0 {offsets = [0, 0], sizes = [8, 1], strides = [1, 1]} : vector<8x8xf32> to vector<8x1xf32>
    %2 = vector.shape_cast %1 : vector<8x1xf32> to vector<8x1xf32>
    %3 = vector.broadcast %2 : vector<8x1xf32> to vector<8x32xf32>
    %4 = vector.extract_strided_slice %0 {offsets = [0, 1], sizes = [8, 1], strides = [1, 1]} : vector<8x8xf32> to vector<8x1xf32>
    %5 = vector.shape_cast %4 : vector<8x1xf32> to vector<8x1xf32>
    %6 = vector.broadcast %5 : vector<8x1xf32> to vector<8x32xf32>
    %7 = vector.extract_strided_slice %0 {offsets = [0, 2], sizes = [8, 1], strides = [1, 1]} : vector<8x8xf32> to vector<8x1xf32>
    %8 = vector.shape_cast %7 : vector<8x1xf32> to vector<8x1xf32>
    %9 = vector.broadcast %8 : vector<8x1xf32> to vector<8x32xf32>
    %10 = vector.extract_strided_slice %0 {offsets = [0, 3], sizes = [8, 1], strides = [1, 1]} : vector<8x8xf32> to vector<8x1xf32>
    %11 = vector.shape_cast %10 : vector<8x1xf32> to vector<8x1xf32>
    %12 = vector.broadcast %11 : vector<8x1xf32> to vector<8x32xf32>
    %13 = vector.extract_strided_slice %0 {offsets = [0, 4], sizes = [8, 1], strides = [1, 1]} : vector<8x8xf32> to vector<8x1xf32>
    %14 = vector.shape_cast %13 : vector<8x1xf32> to vector<8x1xf32>
    %15 = vector.broadcast %14 : vector<8x1xf32> to vector<8x32xf32>
    %16 = vector.extract_strided_slice %0 {offsets = [0, 5], sizes = [8, 1], strides = [1, 1]} : vector<8x8xf32> to vector<8x1xf32>
    %17 = vector.shape_cast %16 : vector<8x1xf32> to vector<8x1xf32>
    %18 = vector.broadcast %17 : vector<8x1xf32> to vector<8x32xf32>
    %19 = vector.extract_strided_slice %0 {offsets = [0, 6], sizes = [8, 1], strides = [1, 1]} : vector<8x8xf32> to vector<8x1xf32>
    %20 = vector.shape_cast %19 : vector<8x1xf32> to vector<8x1xf32>
    %21 = vector.broadcast %20 : vector<8x1xf32> to vector<8x32xf32>
    %22 = vector.extract_strided_slice %0 {offsets = [0, 7], sizes = [8, 1], strides = [1, 1]} : vector<8x8xf32> to vector<8x1xf32>
    %23 = vector.shape_cast %22 : vector<8x1xf32> to vector<8x1xf32>
    %24 = vector.broadcast %23 : vector<8x1xf32> to vector<8x32xf32>
    %25 = tpu.concatenate %3, %6, %9, %12, %15, %18, %21, %24 in 1 : vector<8x32xf32>, vector<8x32xf32>, vector<8x32xf32>, vector<8x32xf32>, vector<8x32xf32>, vector<8x32xf32>, vector<8x32xf32>, vector<8x32xf32> -> vector<8x256xf32>
    %c0_1 = arith.constant 0 : index
    %c0_2 = arith.constant 0 : index
    %26 = vector.load %arg2[%c0_1, %c0_2] : memref<1x256xf32, #tpu.memory_space<vmem>>, vector<1x256xf32>
    %27 = vector.broadcast %26 : vector<1x256xf32> to vector<8x256xf32>
    %28 = arith.mulf %25, %27 : vector<8x256xf32>
    %cst = arith.constant 0.159154937 : f32
    %29 = vector.broadcast %cst : f32 to vector<8x256xf32>
    %30 = arith.mulf %28, %29 : vector<8x256xf32>
    %cst_3 = arith.constant 5.000000e-01 : f32
    %31 = vector.broadcast %cst_3 : f32 to vector<8x256xf32>
    %32 = arith.addf %30, %31 : vector<8x256xf32>
    %33 = math.floor %32 : vector<8x256xf32>
    %cst_4 = arith.constant 6.281250e+00 : f32
    %34 = vector.broadcast %cst_4 : f32 to vector<8x256xf32>
    %35 = arith.mulf %33, %34 : vector<8x256xf32>
    %36 = arith.subf %28, %35 : vector<8x256xf32>
    %cst_5 = arith.constant 0.00193530717 : f32
    %37 = vector.broadcast %cst_5 : f32 to vector<8x256xf32>
    %38 = arith.mulf %33, %37 : vector<8x256xf32>
    %39 = arith.subf %36, %38 : vector<8x256xf32>
    %c0_6 = arith.constant 0 : index
    %c0_7 = arith.constant 0 : index
    %40 = vector.load %arg3[%c0_6, %c0_7] : memref<1x256xf32, #tpu.memory_space<vmem>>, vector<1x256xf32>
    %41 = vector.broadcast %40 : vector<1x256xf32> to vector<8x256xf32>
    %42 = arith.addf %39, %41 : vector<8x256xf32>
    %43 = math.sin %42 : vector<8x256xf32>
    %c0_8 = arith.constant 0 : index
    %c0_9 = arith.constant 0 : index
    %44 = vector.load %arg4[%c0_8, %c0_9] : memref<8x256xf32, #tpu.memory_space<vmem>>, vector<8x256xf32>
    tpu.vector_store %arg4[%c0_8, %c0_9], %43 {strides = array<i32>} : memref<8x256xf32, #tpu.memory_space<vmem>>, vector<8x256xf32>,
    return
  }
  func.func @transform_0(%arg0: i32) -> (i32, i32) {
    %c0_i32 = arith.constant 0 : i32
    %c0_i32_0 = arith.constant 0 : i32
    return %arg0, %c0_i32 : i32, i32
  }
  func.func @transform_1(%arg0: i32) -> (i32, i32) {
    %c0_i32 = arith.constant 0 : i32
    %c0_i32_0 = arith.constant 0 : i32
    %c0_i32_1 = arith.constant 0 : i32
    return %c0_i32, %c0_i32_0 : i32, i32
  }
  func.func @transform_2(%arg0: i32) -> (i32, i32) {
    %c0_i32 = arith.constant 0 : i32
    %c0_i32_0 = arith.constant 0 : i32
    %c0_i32_1 = arith.constant 0 : i32
    return %c0_i32, %c0_i32_0 : i32, i32
  }
  func.func @transform_3(%arg0: i32) -> (i32, i32) {
    %c0_i32 = arith.constant 0 : i32
    %c0_i32_0 = arith.constant 0 : i32
    return %arg0, %c0_i32 : i32, i32
  }
}

</mosaic_0001>

<llo_original>
// kernel: tpu_custom_call.1
$region0: #{tpu_custom_call.1}
  #allocation0 [shape = 'u32[]', space=smem, size = 0x4, offset = 0x4, fixed_abs, tag = 'smem constant byte address 0x4 - core index']
  #allocation1 [shape = 'u32[144,128]{1,0:T(1,128)}', space=vmem, size = 0x12000, scoped, tag = 'internal scratch']
  %s0 = inlined_call_operand.hbm [shape: f32[8,8], index: 0, kind: input, shape index: {}]
  %s1 = inlined_call_operand.vmem [shape: f32[1,256], index: 1, kind: input, shape index: {}]
  %s2 = inlined_call_operand.vmem [shape: f32[1,256], index: 2, kind: input, shape index: {}]
  %s3 = inlined_call_operand.hbm [shape: f32[8,256], index: 3, kind: output, shape index: {}]
  %s4 = sld [smem:[#allocation0]]
  $region26: #{tpu_custom_call.1} parent=0
    _
  %s6 = ssub.s32 1, %s4
  %s7 = scalar_select 0, %s6, %s4
  $region1: #{tpu_custom_call.1} parent=0
    #allocation2 [shape = 'u8[4096]{0}', space=vmem, size = 0x1000, scoped, tag = 'input window, operand 0, single buffered']
    #allocation3 [shape = 's32[1]{0}', space=sflag, size = 0x4, scoped, tag = 'scoped memory for tpu_custom_call.1']
    #allocation4 [shape = 's32[1]{0}', space=sflag, size = 0x4, scoped, tag = 'scoped memory for tpu_custom_call.1']
    #allocation5 [shape = 'u8[8192]{0}', space=vmem, size = 0x2000, scoped, tag = 'output window, operand 0, single buffered']
    %8 = vsyncpa [#allocation3], 0
    %9 = vsyncpa [#allocation4], 0
    // Predicated region
    $region2: #{tpu_custom_call.1} parent=1 // pred_check
      _
    $region3: #{tpu_custom_call.1} parent=1 // pred_check_branch
      %11 = sbr.rel (0) target = $region5
    $region4: #{tpu_custom_call.1} parent=1 // pred_region
      %s13 = ssub.s32 128, 128
      %14 = vsyncadd [#allocation3], %s13
      %s16 = sshll.u32 [#allocation2], 4
      %s17 = int_to_ptr.vmem [resolvable:$true] %s16
      %19 = dma.hbm_to_vmem [thread:$0]  %s0, 128, %s17, [#allocation3]
    $region5: #{tpu_custom_call.1} parent=1 // pred_fallthru
      _
    // Predicated region
    $region6: #{tpu_custom_call.1} parent=1 // pred_check
      _
    $region7: #{tpu_custom_call.1} parent=1 // pred_check_branch
      %21 = sbr.rel (0) target = $region9
    $region8: #{tpu_custom_call.1} parent=1 // pred_region
      _
    $region9: #{tpu_custom_call.1} parent=1 // pred_fallthru
      _
    // Predicated region
    $region10: #{tpu_custom_call.1} parent=1 // pred_check
      _
    $region11: #{tpu_custom_call.1} parent=1 // pred_check_branch
      %23 = sbr.rel (0) target = $region13
    $region12: #{tpu_custom_call.1} parent=1 // pred_region
      _
    $region13: #{tpu_custom_call.1} parent=1 // pred_fallthru
      _
    // Predicated region
    $region14: #{tpu_custom_call.1} parent=1 // pred_check
      _
    $region15: #{tpu_custom_call.1} parent=1 // pred_check_branch
      %25 = sbr.rel (0) target = $region17
    $region16: #{tpu_custom_call.1} parent=1 // pred_region
      %26 = dma.done [#allocation3], 128
    $region17: #{tpu_custom_call.1} parent=1 // pred_fallthru
      _
    %v27 = vld [vmem:[#allocation2] sm:$0xff]
    %29 = vset.pattern.permute.xlu0 0
    %30 = vperm.xlu0 %29, %v27
    %v31 = vpop.permute.xlu0 %30
    %33 = vset.pattern.permute.xlu0 1
    %34 = vperm.xlu0 %33, %v27
    %v35 = vpop.permute.xlu0 %34
    %37 = vset.pattern.permute.xlu0 2
    %38 = vperm.xlu0 %37, %v27
    %v39 = vpop.permute.xlu0 %38
    %41 = vset.pattern.permute.xlu0 3
    %42 = vperm.xlu0 %41, %v27
    %v43 = vpop.permute.xlu0 %42
    %45 = vset.pattern.permute.xlu0 4
    %46 = vperm.xlu0 %45, %v27
    %v47 = vpop.permute.xlu0 %46
    %49 = vset.pattern.permute.xlu0 5
    %50 = vperm.xlu0 %49, %v27
    %v51 = vpop.permute.xlu0 %50
    %53 = vset.pattern.permute.xlu0 6
    %54 = vperm.xlu0 %53, %v27
    %v55 = vpop.permute.xlu0 %54
    %57 = vset.pattern.permute.xlu0 7
    %58 = vperm.xlu0 %57, %v27
    %v59 = vpop.permute.xlu0 %58
    %vm61 = vcmask 261120
    %v62 = vsel %vm61, %v31, %v35
    %vm63 = vcmask 523264
    %v64 = vsel %vm63, %v62, %v39
    %vm65 = vcmask 785408
    %v66 = vsel %vm65, %v64, %v43
    %v67 = vsel %vm61, %v47, %v51
    %v68 = vsel %vm63, %v67, %v55
    %v69 = vsel %vm65, %v68, %v59
    %v70 = vld [vmem:[%s1] sm:$0x3]
    %v72 = vlaneseq
    %v73 = vshrl.u32 %v72, 7
    %v74 = vsub.s32 0, %v73
    %v75 = vrot.slane %v70, %v74
    %v76 = vlaneseq
    %v77 = vshrl.u32 %v76, 7
    %v78 = vsub.s32 1, %v77
    %v79 = vrot.slane %v70, %v78
    %v82 = vmul.f32 %v66, %v75
    %v83 = vmul.f32 %v69, %v79
    %v84 = vmul.f32 %v82, 0.15915494
    %v85 = vmul.f32 %v83, 0.15915494
    %v86 = vadd.f32 %v84, 0.5
    %v87 = vadd.f32 %v85, 0.5
    %v88 = vfloor.f32 %v86
    %v89 = vfloor.f32 %v87
    %v90 = vmul.f32 %v88, 6.28125
    %v91 = vmul.f32 %v89, 6.28125
    %v92 = vsub.f32 %v82, %v90
    %v93 = vsub.f32 %v83, %v91
    %v94 = vmul.f32 %v88, 0.0019353072
    %v95 = vmul.f32 %v89, 0.0019353072
    %v96 = vsub.f32 %v92, %v94
    %v97 = vsub.f32 %v93, %v95
    %v98 = vld [vmem:[%s2] sm:$0x3]
    %v100 = vlaneseq
    %v101 = vshrl.u32 %v100, 7
    %v102 = vsub.s32 0, %v101
    %v103 = vrot.slane %v98, %v102
    %v104 = vlaneseq
    %v105 = vshrl.u32 %v104, 7
    %v106 = vsub.s32 1, %v105
    %v107 = vrot.slane %v98, %v106
    %v110 = vadd.f32 %v96, %v103
    %v111 = vadd.f32 %v97, %v107
    %v112 = vand.u32 2147483647, %v110
    %vm113 = vcmp.le.f32.partialorder %v112, 0.7853982
    %vm114 = vcmp.lt.s32.totalorder %v110, 0
    %v115 = vand.u32 %v110, 2139095040
    %v116 = vshrl.u32 %v115, 23
    %v117 = vsub.s32 %v116, 127
    %v118 = vand.u32 2147483647, %v110
    %v119 = vand.u32 %v118, 8388607
    %v120 = vor.u32 %v119, 8388608
    %v121 = vsub.s32 0, %v120
    %v122 = vadd.s32 %v117, 1
    %vm123 = vcmp.gt.s32.totalorder %v122, 0
    %v124 = vsel %vm123, %v122, 0
    %v125 = vshrl.u32 %v124, 5
    %v126 = vand.u32 %v124, 31
    %v127 = vsub.s32 32, %v126
    %v128 = vshrl.u32 683565275, %v127
    %v129 = vshll.u32 683565275, %v126
    %v130 = vshrl.u32 2475754826, %v127
    %v131 = vor.u32 %v129, %v130
    %v132 = vshll.u32 2475754826, %v126
    %v133 = vshrl.u32 2131351028, %v127
    %v134 = vor.u32 %v132, %v133
    %v135 = vshll.u32 2131351028, %v126
    %v136 = vshrl.u32 2102212464, %v127
    %v137 = vor.u32 %v135, %v136
    %v138 = vshll.u32 2102212464, %v126
    %v139 = vshrl.u32 920167782, %v127
    %v140 = vor.u32 %v138, %v139
    %v141 = vshll.u32 920167782, %v126
    %v142 = vshrl.u32 1326507024, %v127
    %v143 = vor.u32 %v141, %v142
    %vm144 = vcmp.lt.s32.totalorder %v125, 1
    %vm145 = vcmp.lt.s32.totalorder %v125, 2
    %vm146 = vcmp.lt.s32.totalorder %v125, 3
    %vm147 = vcmp.lt.s32.totalorder %v125, 4
    %v148 = vsel %vm144, %v128, %v131
    %v149 = vsel %vm147, %v137, 2102212464
    %v150 = vsel %vm146, %v134, %v149
    %v151 = vsel %vm145, %v148, %v150
    %v152 = vsel %vm144, %v131, %v134
    %v153 = vsel %vm147, %v140, 920167782
    %v154 = vsel %vm146, %v137, %v153
    %v155 = vsel %vm145, %v152, %v154
    %v156 = vsel %vm144, %v134, %v137
    %v157 = vsel %vm147, %v143, 1326507024
    %v158 = vsel %vm146, %v140, %v157
    %v159 = vsel %vm145, %v156, %v158
    %v160 = vshll.u32 %v120, 8
    %v161 = vmul.u32.u64.compose %v160, %v159
    %v162 = vextract.low.u32 %v161
    %v163 = vextract.high.u32 %v161
    %v164 = vmul.u32.u64.compose %v160, %v155
    %v165 = vextract.low.u32 %v164
    %v166 = vextract.high.u32 %v164
    %v167 = vmul.u32 %v160, %v151
    %v168 = vadd.s32 %v163, %v165
    %vm169 = vc.u32 %v163, %v165
    %v170 = vadd.s32 %v166, 1
    %v171 = vsel %vm169, %v170, %v166
    %v172 = vadd.s32 %v167, %v171
    %v173 = vadd.s32 %v172, 536870912
    %v174 = vshrl.u32 %v173, 30
    %v175 = vshll.u32 %v174, 30
    %v176 = vsub.s32 %v172, %v175
    %vm177 = vcmp.lt.s32.totalorder %v176, 0
    %v178 = vsub.s32 0, %v176
    %v179 = vsel %vm177, %v178, %v176
    %v180 = vclz %v179
    %v181 = vsub.s32 %v180, 2
    %vm182 = vcmp.gt.s32.totalorder 0, %v181
    %v183 = vsel %vm182, 0, %v181
    %v184 = vsub.s32 32, %v183
    %v185 = vshll.u32 %v176, %v183
    %v186 = vshrl.u32 %v168, %v184
    %v187 = vor.u32 %v185, %v186
    %v188 = vsub.s32 4294967266, %v183
    %v189 = vadd.s32 %v188, 127
    %v190 = vshll.u32 %v189, 23
    %v191 = vor.u32 4788187, %v190
    %v192 = vand.u32 2147483647, %v191
    %v194 = vcvt.s32.f32 %v187
    %v195 = vmul.f32 %v194, %v192
    %v196 = vxor.u32 %v195, 2147483648
    %v197 = vsel %vm114, %v196, %v195
    %v198 = vsub.s32 4, %v174
    %v199 = vsel %vm114, %v198, %v174
    %v200 = vsel %vm113, %v110, %v197
    %v201 = vsel %vm113, 0, %v199
    %v202 = vcosq.f32.pop %v200
    %v203 = vsinq.f32.pop %v200
    %vm204 = vweird.f32 %v110
    %v205 = vadd.s32 %v201, 3
    %v206 = vand.u32 %v205, 3
    %vm207 = vcmp.lt.s32.totalorder %v206, 2
    %vm208 = vcmp.eq.s32.totalorder %v206, 0
    %v209 = vxor.u32 %v203, 2147483648
    %v210 = vsel %vm208, %v202, %v209
    %vm211 = vcmp.eq.s32.totalorder %v206, 2
    %v212 = vxor.u32 %v202, 2147483648
    %v213 = vsel %vm211, %v212, %v203
    %v214 = vsel %vm207, %v210, %v213
    %v215 = vsel %vm204, nan, %v214
    %v216 = vand.u32 2147483647, %v111
    %vm217 = vcmp.le.f32.partialorder %v216, 0.7853982
    %vm218 = vcmp.lt.s32.totalorder %v111, 0
    %v219 = vand.u32 %v111, 2139095040
    %v220 = vshrl.u32 %v219, 23
    %v221 = vsub.s32 %v220, 127
    %v222 = vand.u32 2147483647, %v111
    %v223 = vand.u32 %v222, 8388607
    %v224 = vor.u32 %v223, 8388608
    %v225 = vsub.s32 0, %v224
    %v226 = vadd.s32 %v221, 1
    %vm227 = vcmp.gt.s32.totalorder %v226, 0
    %v228 = vsel %vm227, %v226, 0
    %v229 = vshrl.u32 %v228, 5
    %v230 = vand.u32 %v228, 31
    %v231 = vsub.s32 32, %v230
    %v232 = vshrl.u32 683565275, %v231
    %v233 = vshll.u32 683565275, %v230
    %v234 = vshrl.u32 2475754826, %v231
    %v235 = vor.u32 %v233, %v234
    %v236 = vshll.u32 2475754826, %v230
    %v237 = vshrl.u32 2131351028, %v231
    %v238 = vor.u32 %v236, %v237
    %v239 = vshll.u32 2131351028, %v230
    %v240 = vshrl.u32 2102212464, %v231
    %v241 = vor.u32 %v239, %v240
    %v242 = vshll.u32 2102212464, %v230
    %v243 = vshrl.u32 920167782, %v231
    %v244 = vor.u32 %v242, %v243
    %v245 = vshll.u32 920167782, %v230
    %v246 = vshrl.u32 1326507024, %v231
    %v247 = vor.u32 %v245, %v246
    %vm248 = vcmp.lt.s32.totalorder %v229, 1
    %vm249 = vcmp.lt.s32.totalorder %v229, 2
    %vm250 = vcmp.lt.s32.totalorder %v229, 3
    %vm251 = vcmp.lt.s32.totalorder %v229, 4
    %v252 = vsel %vm248, %v232, %v235
    %v253 = vsel %vm251, %v241, 2102212464
    %v254 = vsel %vm250, %v238, %v253
    %v255 = vsel %vm249, %v252, %v254
    %v256 = vsel %vm248, %v235, %v238
    %v257 = vsel %vm251, %v244, 920167782
    %v258 = vsel %vm250, %v241, %v257
    %v259 = vsel %vm249, %v256, %v258
    %v260 = vsel %vm248, %v238, %v241
    %v261 = vsel %vm251, %v247, 1326507024
    %v262 = vsel %vm250, %v244, %v261
    %v263 = vsel %vm249, %v260, %v262
    %v264 = vshll.u32 %v224, 8
    %v265 = vmul.u32.u64.compose %v264, %v263
    %v266 = vextract.low.u32 %v265
    %v267 = vextract.high.u32 %v265
    %v268 = vmul.u32.u64.compose %v264, %v259
    %v269 = vextract.low.u32 %v268
    %v270 = vextract.high.u32 %v268
    %v271 = vmul.u32 %v264, %v255
    %v272 = vadd.s32 %v267, %v269
    %vm273 = vc.u32 %v267, %v269
    %v274 = vadd.s32 %v270, 1
    %v275 = vsel %vm273, %v274, %v270
    %v276 = vadd.s32 %v271, %v275
    %v277 = vadd.s32 %v276, 536870912
    %v278 = vshrl.u32 %v277, 30
    %v279 = vshll.u32 %v278, 30
    %v280 = vsub.s32 %v276, %v279
    %vm281 = vcmp.lt.s32.totalorder %v280, 0
    %v282 = vsub.s32 0, %v280
    %v283 = vsel %vm281, %v282, %v280
    %v284 = vclz %v283
    %v285 = vsub.s32 %v284, 2
    %vm286 = vcmp.gt.s32.totalorder 0, %v285
    %v287 = vsel %vm286, 0, %v285
    %v288 = vsub.s32 32, %v287
    %v289 = vshll.u32 %v280, %v287
    %v290 = vshrl.u32 %v272, %v288
    %v291 = vor.u32 %v289, %v290
    %v292 = vsub.s32 4294967266, %v287
    %v293 = vadd.s32 %v292, 127
    %v294 = vshll.u32 %v293, 23
    %v295 = vor.u32 4788187, %v294
    %v296 = vand.u32 2147483647, %v295
    %v298 = vcvt.s32.f32 %v291
    %v299 = vmul.f32 %v298, %v296
    %v300 = vxor.u32 %v299, 2147483648
    %v301 = vsel %vm218, %v300, %v299
    %v302 = vsub.s32 4, %v278
    %v303 = vsel %vm218, %v302, %v278
    %v304 = vsel %vm217, %v111, %v301
    %v305 = vsel %vm217, 0, %v303
    %v306 = vcosq.f32.pop %v304
    %v307 = vsinq.f32.pop %v304
    %vm308 = vweird.f32 %v111
    %v309 = vadd.s32 %v305, 3
    %v310 = vand.u32 %v309, 3
    %vm311 = vcmp.lt.s32.totalorder %v310, 2
    %vm312 = vcmp.eq.s32.totalorder %v310, 0
    %v313 = vxor.u32 %v307, 2147483648
    %v314 = vsel %vm312, %v306, %v313
    %vm315 = vcmp.eq.s32.totalorder %v310, 2
    %v316 = vxor.u32 %v306, 2147483648
    %v317 = vsel %vm315, %v316, %v307
    %v318 = vsel %vm311, %v314, %v317
    %v319 = vsel %vm308, nan, %v318
    %320 = vst [vmem:[#allocation5] sm:$0xff] %v215
    %321 = vst [vmem:[#allocation5 + $0x8] sm:$0xff] %v319
    // Predicated region
    $region18: #{tpu_custom_call.1} parent=1 // pred_check
      _
    $region19: #{tpu_custom_call.1} parent=1 // pred_check_branch
      %323 = sbr.rel (0) target = $region21
    $region20: #{tpu_custom_call.1} parent=1 // pred_region
      %s325 = ssub.s32 256, 256
      %326 = vsyncadd [#allocation4], %s325
      %s328 = sshll.u32 [#allocation5], 4
      %s329 = int_to_ptr.vmem [resolvable:$true] %s328
      %331 = dma.vmem_to_hbm [thread:$0]  %s329, 256, %s3, [#allocation4]
    $region21: #{tpu_custom_call.1} parent=1 // pred_fallthru
      _
    // Predicated region
    $region22: #{tpu_custom_call.1} parent=1 // pred_check
      _
    $region23: #{tpu_custom_call.1} parent=1 // pred_check_branch
      %333 = sbr.rel (0) target = $region25
    $region24: #{tpu_custom_call.1} parent=1 // pred_region
      %334 = dma.done [#allocation4], 256
    $region25: #{tpu_custom_call.1} parent=1 // pred_fallthru
      _
    %335 = vsyncpa [#allocation3], 1
    %336 = vsyncpa [#allocation4], 1

</llo_original>
